<compile_context>
chip_gen: v7x
topology: tpu7x:2x2x1
jax: 0.10.0
libtpu: 0.0.40
codegen_flags: <defaults>
</compile_context>

<pallas_src>
import functools

import jax
import jax.numpy as jnp
from jax.experimental import pallas as pl
from jax.experimental.pallas import tpu as pltpu


def _accuracy_kernel(pred_ref, y_ref, count_ref, *, total_rows):
    """Process one batch tile: write #rows where argmax(pred) == y."""
    i = pl.program_id(0)

    pred = pred_ref[...]                      # (TB, C), native dtype
    y = y_ref[...]                            # (TB, 1) int32
    tb, c = pred.shape

    # argmax along the class (lane) axis: max-reduce + masked index-min.
    # First occurrence on ties -> matches torch.argmax / jnp.argmax.
    col_ids = jax.lax.broadcasted_iota(jnp.int32, (tb, c), 1)
    max_val = jnp.max(pred, axis=1, keepdims=True)              # (TB, 1)
    arg = jnp.min(jnp.where(pred == max_val, col_ids, c),
                  axis=1, keepdims=True)                        # (TB, 1)

    correct = (arg == y).astype(jnp.int32)                      # (TB, 1)

    if total_rows % tb != 0:
        # Only the (single) partial last tile contains out-of-range rows; the
        # compare is trivially true elsewhere and is pure VPU filler under the
        # streaming DMA, so no extra gating is needed.
        row_ids = i * tb + jax.lax.broadcasted_iota(jnp.int32, (tb, 1), 0)
        correct = jnp.where(row_ids < total_rows, correct, 0)

    # Each grid step owns its own (1,1,1) output block -> safe under a fully
    # "parallel" grid (no shared accumulator, no init phase needed).
    count_ref[0] = jnp.sum(correct, keepdims=True)              # (1, 1)


def _vmem_capacity_bytes():
    try:
        return int(pltpu.get_tpu_info().vmem_capacity_bytes)
    except Exception:
        return 64 * 1024 * 1024   # conservative fallback (v7x-sized)


def accuracy(pred_y, y, *, tile_b=None):
    """pred_y: [B, n_classes] float (any dtype); y: [B] int labels -> scalar accuracy."""
    B, C = pred_y.shape
    y2 = y.astype(jnp.int32).reshape(B, 1)
    itemsize = jnp.dtype(pred_y.dtype).itemsize

    # --- generation-aware VMEM budgeting -------------------------------------
    vmem_cap = _vmem_capacity_bytes()
    if vmem_cap >= 100 * 1024 * 1024:
        # v5e / v6e: 128 MiB physical VMEM -> large tiles cost nothing.
        per_buffer_budget = 24 * 1024 * 1024
        vmem_limit = 64 * 1024 * 1024
    else:
        # v7x: 64 MiB physical VMEM, 3.2 TB/s HBM -> tiles >= ~8 MiB, limit 48 MiB.
        per_buffer_budget = 8 * 1024 * 1024
        vmem_limit = 48 * 1024 * 1024

    # Sublane packing multiple for the input dtype (f32: 8, bf16: 16, int8: 32).
    sub_mult = max(8, 32 // max(1, itemsize))

    if tile_b is None:
        # VMEM footprint per row: pred row lane-padded to a multiple of 128
        # lanes, plus the lane-padded y row (~64 B/row for int32).
        c_pad = ((C + 127) // 128) * 128
        row_bytes = c_pad * itemsize + 64
        tile_b = int(max(sub_mult, per_buffer_budget // row_bytes))
    tile_b = int(min(tile_b, B))
    if tile_b < B:
        # When actually tiling, keep the sublane (second-to-minor) dim a
        # multiple of the packing factor; a single full-extent block is exempt.
        tile_b = max(sub_mult, (tile_b // sub_mult) * sub_mult)
    num_tiles = pl.cdiv(B, tile_b)

    # TODO(synk): for vocab-scale n_classes where a single row blows the
    # per-buffer budget, add a second ("arbitrary") grid axis over classes with
    # an online running-max/argmin to bound per-tile VMEM.
    counts = pl.pallas_call(
        functools.partial(_accuracy_kernel, total_rows=B),
        out_shape=jax.ShapeDtypeStruct((num_tiles, 1, 1), jnp.int32),
        grid=(num_tiles,),
        in_specs=[
            pl.BlockSpec((tile_b, C), lambda i: (i, 0)),
            pl.BlockSpec((tile_b, 1), lambda i: (i, 0)),
        ],
        out_specs=pl.BlockSpec((1, 1, 1), lambda i: (i, 0, 0)),
        compiler_params=pltpu.CompilerParams(
            dimension_semantics=("parallel",),
            vmem_limit_bytes=vmem_limit,
        ),
    )(pred_y, y2)

    # Tiny final reduction + the single divide by the GLOBAL batch size
    # (matches torch: sum(...) / y.shape[0]).
    return jnp.sum(counts).astype(jnp.float32) / jnp.float32(B)


if __name__ == "__main__":
    key = jax.random.PRNGKey(0)
    k1, k2, k3, k4, k5, k6 = jax.random.split(key, 6)

    # Case 1: small batch, single full-extent tile (auto tile sizing).
    b1, c1 = 16, 32
    pred1 = jax.random.normal(k1, (b1, c1), dtype=jnp.float32)
    y1 = jax.random.randint(k2, (b1,), 0, c1, dtype=jnp.int32)
    acc1 = jax.block_until_ready(accuracy(pred1, y1))
    ref1 = jnp.sum(jnp.argmax(pred1, axis=1) == y1) / y1.shape[0]
    assert jnp.allclose(acc1, ref1), (acc1, ref1)

    # Case 2: ragged batch, forced multi-tile "parallel" grid (partial last
    # tile masked, per-tile counts summed in the wrapper).
    b2, c2 = 13, 32
    pred2 = jax.random.normal(k3, (b2, c2), dtype=jnp.float32)
    y2 = jax.random.randint(k4, (b2,), 0, c2, dtype=jnp.int32)
    acc2 = jax.block_until_ready(accuracy(pred2, y2, tile_b=8))
    ref2 = jnp.sum(jnp.argmax(pred2, axis=1) == y2) / y2.shape[0]
    assert jnp.allclose(acc2, ref2), (acc2, ref2)

    # Case 3: bf16 input, multi-tile, exercises sublane-multiple rounding
    # (tile_b=24 -> rounds down to 16 for bf16) and a partial last tile.
    b3, c3 = 40, 10
    pred3 = jax.random.normal(k5, (b3, c3), dtype=jnp.bfloat16)
    y3 = jax.random.randint(k6, (b3,), 0, c3, dtype=jnp.int32)
    acc3 = jax.block_until_ready(accuracy(pred3, y3, tile_b=24))
    ref3 = jnp.sum(jnp.argmax(pred3, axis=1) == y3) / y3.shape[0]
    assert jnp.allclose(acc3, ref3), (acc3, ref3)

    print("KERNEL_OK")
</pallas_src>

<mosaic_0001>
module attributes {stable_mosaic.version = 11 : i64} {
  func.func @_accuracy_kernel(%arg0: i32, %arg1: memref<16x32xf32, #tpu.memory_space<vmem>>, %arg2: memref<16x1xi32, #tpu.memory_space<vmem>>, %arg3: memref<1x1x1xi32, #tpu.memory_space<vmem>>) attributes {dimension_semantics = [#tpu.dimension_semantics<parallel>], iteration_bounds = array<i64: 1>, scalar_prefetch = 0 : i64, scratch_operands = 0 : i64, tpu.core_type = #tpu.core_type<tc>, window_params = [{transform_indices = @transform_0, window_bounds = array<i64: 16, 32>}, {transform_indices = @transform_1, window_bounds = array<i64: 16, 1>}, {transform_indices = @transform_2, window_bounds = array<i64: 1, 1, 1>}]} {
    %c0 = arith.constant 0 : index
    %c0_0 = arith.constant 0 : index
    %0 = vector.load %arg1[%c0, %c0_0] : memref<16x32xf32, #tpu.memory_space<vmem>>, vector<16x32xf32>
    %c0_1 = arith.constant 0 : index
    %c0_2 = arith.constant 0 : index
    %1 = vector.load %arg2[%c0_1, %c0_2] : memref<16x1xi32, #tpu.memory_space<vmem>>, vector<16x1xi32>
    %2 = tpu.iota {dimensions = array<i32: 1>} : vector<16x32xi32>
    %cst = arith.constant dense<0xFF800000> : vector<16xf32>
    %3 = vector.multi_reduction <maximumf>, %0, %cst [1] : vector<16x32xf32> to vector<16xf32>
    %4 = vector.shape_cast %3 : vector<16xf32> to vector<16x1xf32>
    %5 = vector.broadcast %4 : vector<16x1xf32> to vector<16x32xf32>
    %6 = arith.cmpf oeq, %0, %5 : vector<16x32xf32>
    %c32_i32 = arith.constant 32 : i32
    %7 = vector.broadcast %c32_i32 : i32 to vector<16x32xi32>
    %8 = arith.select %6, %2, %7 : vector<16x32xi1>, vector<16x32xi32>
    %cst_3 = arith.constant dense<2147483647> : vector<16xi32>
    %9 = vector.multi_reduction <minsi>, %8, %cst_3 [1] : vector<16x32xi32> to vector<16xi32>
    %10 = vector.shape_cast %9 : vector<16xi32> to vector<16x1xi32>
    %11 = arith.cmpi eq, %10, %1 : vector<16x1xi32>
    %12 = arith.extui %11 : vector<16x1xi1> to vector<16x1xi32>
    %13 = vector.shape_cast %12 : vector<16x1xi32> to vector<1x16x1xi32>
    %cst_4 = arith.constant dense<0> : vector<1xi32>
    %14 = vector.multi_reduction <add>, %13, %cst_4 [1, 2] : vector<1x16x1xi32> to vector<1xi32>
    %15 = vector.shape_cast %14 : vector<1xi32> to vector<1x1x1xi32>
    %16 = vector.extract %15[0, 0, 0] : i32 from vector<1x1x1xi32>
    %17 = vector.broadcast %16 : i32 to vector<1x1xi32>
    %c0_5 = arith.constant 0 : index
    %c0_6 = arith.constant 0 : index
    %c0_7 = arith.constant 0 : index
    %18 = vector.load %arg3[%c0_5, %c0_6, %c0_7] : memref<1x1x1xi32, #tpu.memory_space<vmem>>, vector<1x1x1xi32>
    %19 = vector.shape_cast %18 : vector<1x1x1xi32> to vector<1x1xi32>
    %20 = vector.shape_cast %17 : vector<1x1xi32> to vector<1x1x1xi32>
    tpu.vector_store %arg3[%c0_5, %c0_6, %c0_7], %20 {strides = array<i32>} : memref<1x1x1xi32, #tpu.memory_space<vmem>>, vector<1x1x1xi32>,
    return
  }
  func.func @transform_0(%arg0: i32) -> (i32, i32) {
    %c0_i32 = arith.constant 0 : i32
    %c0_i32_0 = arith.constant 0 : i32
    return %arg0, %c0_i32 : i32, i32
  }
  func.func @transform_1(%arg0: i32) -> (i32, i32) {
    %c0_i32 = arith.constant 0 : i32
    %c0_i32_0 = arith.constant 0 : i32
    return %arg0, %c0_i32 : i32, i32
  }
  func.func @transform_2(%arg0: i32) -> (i32, i32, i32) {
    %c0_i32 = arith.constant 0 : i32
    %c0_i32_0 = arith.constant 0 : i32
    %c0_i32_1 = arith.constant 0 : i32
    return %arg0, %c0_i32, %c0_i32_0 : i32, i32, i32
  }
}

</mosaic_0001>

<llo_original>
// kernel: tpu_custom_call.1
$region0: #{tpu_custom_call.1}
  #allocation0 [shape = 'u32[]', space=smem, size = 0x4, offset = 0x4, fixed_abs, tag = 'smem constant byte address 0x4 - core index']
  #allocation1 [shape = 'u32[144,128]{1,0:T(1,128)}', space=vmem, size = 0x12000, scoped, tag = 'internal scratch']
  %s0 = inlined_call_operand.vmem [shape: f32[16,32], index: 0, kind: input, shape index: {}]
  %s1 = inlined_call_operand.vmem [shape: s32[16,1], index: 1, kind: input, shape index: {}]
  %s2 = inlined_call_operand.hbm [shape: s32[1,1,1], index: 2, kind: output, shape index: {}]
  %s3 = sld [smem:[#allocation0]]
  $region18: #{tpu_custom_call.1} parent=0
    _
  %s5 = ssub.s32 1, %s3
  %s6 = scalar_select 0, %s5, %s3
  $region1: #{tpu_custom_call.1} parent=0
    #allocation2 [shape = 'u8[512]{0}', space=vmem, size = 0x400, scoped, tag = 'output window, operand 0, single buffered']
    #allocation3 [shape = 's32[1]{0}', space=sflag, size = 0x4, scoped, tag = 'scoped memory for tpu_custom_call.1']
    %7 = vsyncpa [#allocation3], 0
    // Predicated region
    $region2: #{tpu_custom_call.1} parent=1 // pred_check
      _
    $region3: #{tpu_custom_call.1} parent=1 // pred_check_branch
      %9 = sbr.rel (0) target = $region5
    $region4: #{tpu_custom_call.1} parent=1 // pred_region
      _
    $region5: #{tpu_custom_call.1} parent=1 // pred_fallthru
      _
    // Predicated region
    $region6: #{tpu_custom_call.1} parent=1 // pred_check
      _
    $region7: #{tpu_custom_call.1} parent=1 // pred_check_branch
      %11 = sbr.rel (0) target = $region9
    $region8: #{tpu_custom_call.1} parent=1 // pred_region
      _
    $region9: #{tpu_custom_call.1} parent=1 // pred_fallthru
      _
    %v12 = vld [vmem:[%s0] sm:$0xff]
    %v13 = vld [vmem:[%s0 + $0x8] sm:$0xff]
    %v14 = vld [vmem:[%s1] sm:$0xff]
    %v15 = vld [vmem:[%s1 + $0x8] sm:$0xff]
    %v16 = vlaneseq
    %v17 = vand.u32 %v16, 127
    %vm18 = vcmask 261120
    %v19 = vsel %vm18, %v12, -inf
    %20 = vmax.xlane.f32.xlu0 %v19
    %v21 = vpop.xlane.xlu0 %20
    %v22 = vsel %vm18, %v13, -inf
    %23 = vmax.xlane.f32.xlu0 %v22
    %v24 = vpop.xlane.xlu0 %23
    %vm25 = vcmp.eq.f32.partialorder %v12, %v21
    %vm26 = vcmp.eq.f32.partialorder %v13, %v24
    %v27 = vsel %vm25, %v17, 32
    %v28 = vsel %vm26, %v17, 32
    %v29 = vsel %vm18, %v27, 2147483647
    %v30 = vand.u32 %v29, 65535
    %v31 = vshra.s32 %v29, 16
    %v32 = vcvt.s32.f32 %v30
    %v33 = vcvt.s32.f32 %v31
    %34 = vmin.xlane.f32.xlu0 %v33
    %v35 = vpop.xlane.xlu0 %34
    %vm36 = vcmp.eq.f32.partialorder %v33, %v35
    %v37 = vsel %vm36, %v32, inf
    %38 = vmin.xlane.f32.xlu0 %v37
    %v39 = vpop.xlane.xlu0 %38
    %v40 = vcvt.f32.s32 %v39
    %v41 = vcvt.f32.s32 %v35
    %v42 = vshll.u32 %v41, 16
    %v43 = vadd.s32 %v42, %v40
    %v44 = vsel %vm18, %v28, 2147483647
    %v45 = vand.u32 %v44, 65535
    %v46 = vshra.s32 %v44, 16
    %v47 = vcvt.s32.f32 %v45
    %v48 = vcvt.s32.f32 %v46
    %49 = vmin.xlane.f32.xlu0 %v48
    %v50 = vpop.xlane.xlu0 %49
    %vm51 = vcmp.eq.f32.partialorder %v48, %v50
    %v52 = vsel %vm51, %v47, inf
    %53 = vmin.xlane.f32.xlu0 %v52
    %v54 = vpop.xlane.xlu0 %53
    %v55 = vcvt.f32.s32 %v54
    %v56 = vcvt.f32.s32 %v50
    %v57 = vshll.u32 %v56, 16
    %v58 = vadd.s32 %v57, %v55
    %vm59 = vcmp.eq.s32.totalorder %v43, %v14
    %vm60 = vcmp.eq.s32.totalorder %v58, %v15
    %v61 = vsel %vm59, 1, 0
    %v62 = vsel %vm60, 1, 0
    %vm63 = vcmask 7168
    %v64 = vsel %vm63, %v61, 0
    %v65 = vsel %vm63, %v62, 0
    %v66 = vadd.s32 %v64, %v65
    %v67 = vand.u32 %v66, 65535
    %v68 = vshrl.u32 %v66, 16
    %v69 = vcvt.s32.f32 %v67
    %v70 = vcvt.s32.f32 %v68
    %71 = vadd.xlane.f32.xlu0 %v69
    %v72 = vpop.xlane.xlu0 %71
    %73 = vadd.xlane.f32.xlu0 %v70
    %v74 = vpop.xlane.xlu0 %73
    %v75 = vcvt.f32.s32 %v72
    %v76 = vcvt.f32.s32 %v74
    %v77 = vshll.u32 %v76, 16
    %v78 = vadd.s32 %v77, %v75
    %v79 = vrot.slane %v78, 4
    %v80 = vadd.s32 %v78, %v79
    %v81 = vrot.slane %v80, 2
    %v82 = vadd.s32 %v80, %v81
    %v83 = vrot.slane %v82, 1
    %v84 = vadd.s32 %v82, %v83
    %s85 = vtos %v84
    %v86 = vstv %s85
    %vm87 = vcmask 0
    %88 = vst.msk [vmem:[#allocation2] sm:$0x1] %vm87, %v86
    // Predicated region
    $region10: #{tpu_custom_call.1} parent=1 // pred_check
      _
    $region11: #{tpu_custom_call.1} parent=1 // pred_check_branch
      %90 = sbr.rel (0) target = $region13
    $region12: #{tpu_custom_call.1} parent=1 // pred_region
      %s92 = ssub.s32 16, 16
      %93 = vsyncadd [#allocation3], %s92
      %s95 = sshll.u32 [#allocation2], 4
      %s96 = int_to_ptr.vmem [resolvable:$true] %s95
      %98 = dma.vmem_to_hbm [thread:$0]  %s96, 16, %s2, [#allocation3]
    $region13: #{tpu_custom_call.1} parent=1 // pred_fallthru
      _
    // Predicated region
    $region14: #{tpu_custom_call.1} parent=1 // pred_check
      _
    $region15: #{tpu_custom_call.1} parent=1 // pred_check_branch
      %100 = sbr.rel (0) target = $region17
    $region16: #{tpu_custom_call.1} parent=1 // pred_region
      %101 = dma.done [#allocation3], 16
    $region17: #{tpu_custom_call.1} parent=1 // pred_fallthru
      _
    %102 = vsyncpa [#allocation3], 1

</llo_original>
